<compile_context>
chip_gen: v6e
topology: v6e:2x2x1
jax: 0.10.0
libtpu: 0.0.40
codegen_flags: <defaults>
</compile_context>

<pallas_src>
import functools
import math
from typing import NamedTuple

import jax
import jax.numpy as jnp
import numpy as np
from jax.experimental import pallas as pl
from jax.experimental.pallas import tpu as pltpu


class ImageList(NamedTuple):
    tensors: jax.Array                 # [N, C, H_pad, W_pad]
    image_sizes: tuple                 # tuple of (H_new, W_new) per image


# ---------------------------------------------------------------------------
# Interpolation matrices (matches torch F.interpolate, mode='bilinear',
# align_corners=False, recompute_scale_factor=True).  Built with numpy
# broadcasting (no scatter) and memoized via the cached batch builder below.
# ---------------------------------------------------------------------------
def _bilinear_matrix(in_size: int, out_size: int, pad_to: int) -> np.ndarray:
    dst = np.arange(out_size, dtype=np.float64)
    src = (dst + 0.5) * (float(in_size) / float(out_size)) - 0.5
    src = np.maximum(src, 0.0)                      # torch clamps negative src to 0
    i0 = np.clip(np.floor(src).astype(np.int64), 0, in_size - 1)
    i1 = np.minimum(i0 + 1, in_size - 1)
    lam = (src - i0).astype(np.float32)
    cols = np.arange(in_size)[None, :]
    w = np.zeros((pad_to, in_size), np.float32)     # rows >= out_size stay zero (padding)
    w[:out_size] = ((cols == i0[:, None]) * (1.0 - lam[:, None])
                    + (cols == i1[:, None]) * lam[:, None])
    return w


def _pick_tile(total: int, align: int, cap: int = 512) -> int:
    """Largest multiple of `align` <= cap that divides `total`, else `total`."""
    t = min(cap, total)
    t -= t % align
    while t >= align:
        if total % t == 0:
            return t
        t -= align
    return total


# ---------------------------------------------------------------------------
# Pallas kernels: per-channel normalize (VPU) + two bf16 MXU matmuls with f32
# accumulation.  `batch_ref` is the aliased output buffer (never read).
# ---------------------------------------------------------------------------
def _h_first_kernel(mean_ref, istd_ref, x_ref, wh_ref, wwt_ref, batch_ref, o_ref):
    del batch_ref                                    # aliased output; not read here
    c = pl.program_id(0)
    xn = ((x_ref[...].astype(jnp.float32) - mean_ref[c]) * istd_ref[c]).astype(jnp.bfloat16)
    t = jnp.dot(wh_ref[...], xn, preferred_element_type=jnp.float32)          # (tm, W)
    o = jnp.dot(t.astype(jnp.bfloat16), wwt_ref[...],
                preferred_element_type=jnp.float32)                           # (tm, W_pad)
    o_ref[...] = o.astype(o_ref.dtype)


def _w_first_kernel(mean_ref, istd_ref, x_ref, wh_ref, wwt_ref, batch_ref, o_ref):
    del batch_ref
    c = pl.program_id(0)
    xn = ((x_ref[...].astype(jnp.float32) - mean_ref[c]) * istd_ref[c]).astype(jnp.bfloat16)
    t = jnp.dot(xn, wwt_ref[...], preferred_element_type=jnp.float32)         # (H, tn)
    o = jnp.dot(wh_ref[...], t.astype(jnp.bfloat16),
                preferred_element_type=jnp.float32)                           # (H_pad, tn)
    o_ref[...] = o.astype(o_ref.dtype)


# ---------------------------------------------------------------------------
# Per-image pallas_call builder: writes this image's C planes in-place into the
# batched [N, C, H_pad, W_pad] tensor (input_output_aliases).
# ---------------------------------------------------------------------------
def _build_image_call(img_idx, n_images, num_ch, H, W, new_h, new_w,
                      H_pad, W_pad, out_dtype):
    wh = jnp.asarray(_bilinear_matrix(H, new_h, H_pad), dtype=jnp.bfloat16)    # (H_pad, H)
    wwt = jnp.asarray(_bilinear_matrix(W, new_w, W_pad).T, dtype=jnp.bfloat16)  # (W, W_pad)

    # Static choice of matmul association (MAC counts), with the matching tile axis.
    macs_h_first = H_pad * W * (H + W_pad)          # (Wh@x) then @WwT, tiled over H_pad rows
    macs_w_first = H * W_pad * (W + H_pad)          # (x@WwT) then Wh@, tiled over W_pad cols
    use_w_first = (macs_w_first < macs_h_first) and (W_pad % 128 == 0)

    smem = pltpu.MemorySpace.SMEM
    if use_w_first:
        tn = _pick_tile(W_pad, 128)
        grid = (num_ch, W_pad // tn)
        in_specs = [
            pl.BlockSpec(memory_space=smem),                              # mean (C,)
            pl.BlockSpec(memory_space=smem),                              # inv_std (C,)
            pl.BlockSpec((None, H, W), lambda c, j: (c, 0, 0)),           # channel plane
            pl.BlockSpec((H_pad, H), lambda c, j: (0, 0),
                         pipeline_mode=pl.Buffered(1)),                   # constant -> 1 buffer
            pl.BlockSpec((W, tn), lambda c, j: (0, j)),                   # column tile of WwT
            pl.BlockSpec(memory_space=pl.ANY),                            # aliased batch (unused)
        ]
        out_spec = pl.BlockSpec((None, None, H_pad, tn),
                                lambda c, j: (img_idx, c, 0, j))
        kernel = _w_first_kernel
    else:
        tm = _pick_tile(H_pad, 8)
        grid = (num_ch, H_pad // tm)
        in_specs = [
            pl.BlockSpec(memory_space=smem),                              # mean (C,)
            pl.BlockSpec(memory_space=smem),                              # inv_std (C,)
            pl.BlockSpec((None, H, W), lambda c, i: (c, 0, 0)),           # channel plane
            pl.BlockSpec((tm, H), lambda c, i: (i, 0)),                   # row tile of Wh
            pl.BlockSpec((W, W_pad), lambda c, i: (0, 0),
                         pipeline_mode=pl.Buffered(1)),                   # constant -> 1 buffer
            pl.BlockSpec(memory_space=pl.ANY),                            # aliased batch (unused)
        ]
        out_spec = pl.BlockSpec((None, None, tm, W_pad),
                                lambda c, i: (img_idx, c, i, 0))
        kernel = _h_first_kernel

    pc = pl.pallas_call(
        kernel,
        out_shape=jax.ShapeDtypeStruct((n_images, num_ch, H_pad, W_pad), out_dtype),
        grid_spec=pltpu.PrefetchScalarGridSpec(
            num_scalar_prefetch=0,
            grid=grid,
            in_specs=in_specs,
            out_specs=out_spec,
        ),
        input_output_aliases={5: 0},   # batch tensor updated in place (no jnp.stack copy)
        compiler_params=pltpu.CompilerParams(
            dimension_semantics=("parallel", "parallel"),
            vmem_limit_bytes=64 * 1024 * 1024,
        ),
    )

    def call(mean, inv_std, image, batch):
        return pc(mean, inv_std, image, wh, wwt, batch)

    return call


@functools.lru_cache(maxsize=64)
def _get_batch_fn(key):
    """Cached, jitted function: (mean, inv_std, *images) -> [N,C,H_pad,W_pad]."""
    num_ch, H_pad, W_pad, out_dtype, per_image = key
    n_images = len(per_image)
    calls = [
        _build_image_call(i, n_images, num_ch, H, W, nh, nw, H_pad, W_pad, out_dtype)
        for i, (H, W, nh, nw) in enumerate(per_image)
    ]

    def batch_fn(mean, inv_std, *images):
        batch = jnp.zeros((n_images, num_ch, H_pad, W_pad), out_dtype)
        for call, img in zip(calls, images):
            batch = call(mean, inv_std, img, batch)   # in-place slice write via aliasing
        return batch

    return jax.jit(batch_fn)


# ---------------------------------------------------------------------------
# Module wrapper
# ---------------------------------------------------------------------------
class GeneralizedRCNNTransformPallas:
    """Eval-mode GeneralizedRCNNTransform: normalize + resize + batch (Pallas hot path)."""

    def __init__(self, min_size, max_size, image_mean, image_std,
                 size_divisible=32, fixed_size=None, **kwargs):
        if not isinstance(min_size, (list, tuple)):
            min_size = (min_size,)
        self.min_size = tuple(int(s) for s in min_size)
        self.max_size = float(max_size)
        self.image_mean = jnp.asarray(image_mean, jnp.float32)
        self.inv_std = jnp.asarray(1.0 / np.asarray(image_std, np.float64), jnp.float32)
        self.size_divisible = int(size_divisible)
        self.fixed_size = fixed_size
        self._skip_resize = kwargs.pop("_skip_resize", False)
        # TODO(synk): training-mode random min_size choice (torch_choice) is host RNG,
        # not implemented; eval semantics (min_size[-1]) are used.

    def _new_hw(self, h: int, w: int):
        if self.fixed_size is not None:
            # torchvision: interpolate(size=[fixed_size[1], fixed_size[0]]) -> (H, W)
            return int(self.fixed_size[1]), int(self.fixed_size[0])
        size = float(self.min_size[-1])
        # mimic torch's float32 scale computation, then floor(dim * scale)
        min_s = np.float32(min(h, w))
        max_s = np.float32(max(h, w))
        scale = float(min(np.float32(size) / min_s, np.float32(self.max_size) / max_s))
        return int(math.floor(h * scale)), int(math.floor(w * scale))

    def __call__(self, images, targets=None):
        if targets is not None:
            targets = [dict(t) if t is not None else None for t in targets]

        orig_sizes = []
        for img in images:
            if img.ndim != 3:
                raise ValueError(
                    f"images is expected to be a list of 3d tensors of shape [C, H, W], "
                    f"got {img.shape}")
            if not jnp.issubdtype(img.dtype, jnp.floating):
                raise TypeError(
                    f"Expected input images to be of floating type (in range [0, 1]), "
                    f"but found type {img.dtype} instead")
            orig_sizes.append((int(img.shape[-2]), int(img.shape[-1])))
        new_sizes = [self._new_hw(h, w) for (h, w) in orig_sizes]

        num_ch = int(images[0].shape[0])
        stride = float(self.size_divisible)
        max_h = max(s[0] for s in new_sizes)
        max_w = max(s[1] for s in new_sizes)
        H_pad = int(math.ceil(max_h / stride) * stride)
        W_pad = int(math.ceil(max_w / stride) * stride)
        out_dtype = np.dtype(images[0].dtype)

        key = (num_ch, H_pad, W_pad, out_dtype,
               tuple((h, w, nh, nw)
                     for (h, w), (nh, nw) in zip(orig_sizes, new_sizes)))
        batch_fn = _get_batch_fn(key)
        tensors = batch_fn(self.image_mean, self.inv_std, *images)   # [N,C,H_pad,W_pad]

        if targets is not None:
            for i, t in enumerate(targets):
                if t is None:
                    continue
                (h, w), (nh, nw) = orig_sizes[i], new_sizes[i]
                rh = float(np.float32(nh) / np.float32(h))
                rw = float(np.float32(nw) / np.float32(w))
                if "boxes" in t:     # resize_boxes (plain-JAX glue, tiny [N,4])
                    t["boxes"] = t["boxes"] * jnp.asarray(
                        [rw, rh, rw, rh], t["boxes"].dtype)
                if "keypoints" in t:  # resize_keypoints (x*rw, y*rh, vis unchanged)
                    t["keypoints"] = t["keypoints"] * jnp.asarray(
                        [rw, rh, 1.0], t["keypoints"].dtype)
                # TODO(synk): target['masks'] nearest-neighbor resize not implemented here.

        return ImageList(tensors, tuple(new_sizes)), targets


# ---------------------------------------------------------------------------
# Self-test
# ---------------------------------------------------------------------------
if __name__ == "__main__":
    key = jax.random.PRNGKey(0)
    k0, k1, k2, k3, k4 = jax.random.split(key, 5)
    # Small CHW float images in [0, 1], different spatial sizes (list-of-tensors API).
    img0 = jax.random.uniform(k0, (3, 16, 24), jnp.float32)
    img1 = jax.random.uniform(k1, (3, 20, 16), jnp.float32)
    targets = [
        {"boxes": jax.random.uniform(k2, (5, 4), jnp.float32) * 16.0},
        {"boxes": jax.random.uniform(k3, (4, 4), jnp.float32) * 16.0,
         "keypoints": jax.random.uniform(k4, (4, 7, 3), jnp.float32) * 16.0},
    ]

    mean = [0.485, 0.456, 0.406]
    std = [0.229, 0.224, 0.225]
    transform = GeneralizedRCNNTransformPallas(
        min_size=24, max_size=48, image_mean=mean, image_std=std, size_divisible=32)

    image_list, targets_out = transform([img0, img1], targets)
    jax.block_until_ready(image_list.tensors)
    jax.block_until_ready([t["boxes"] for t in targets_out])

    assert image_list.tensors.shape == (2, 3, 32, 64), image_list.tensors.shape
    assert image_list.image_sizes == ((24, 36), (30, 24)), image_list.image_sizes

    # Numerical reference (f32 matrices, plain numpy): checks normalize, resize,
    # zero padding, batching and the in-place aliased writes.  Tolerance covers
    # the bf16 MXU operands.
    mean_np = np.asarray(mean, np.float32)
    std_np = np.asarray(std, np.float32)
    ref = np.zeros((2, 3, 32, 64), np.float32)
    for i, (img, (h, w), (nh, nw)) in enumerate(
            zip([img0, img1], [(16, 24), (20, 16)], [(24, 36), (30, 24)])):
        wh = _bilinear_matrix(h, nh, 32)
        wwt = _bilinear_matrix(w, nw, 64).T
        xn = (np.asarray(img, np.float32) - mean_np[:, None, None]) / std_np[:, None, None]
        ref[i] = np.einsum("ph,chw,wq->cpq", wh, xn, wwt)
    np.testing.assert_allclose(np.asarray(image_list.tensors, np.float32), ref,
                               rtol=0.05, atol=0.05)

    print("KERNEL_OK")
</pallas_src>

<mosaic_0001>
module attributes {stable_mosaic.version = 11 : i64} {
  func.func @_h_first_kernel(%arg0: i32, %arg1: i32, %arg2: memref<3xf32, #tpu.memory_space<smem>>, %arg3: memref<3xf32, #tpu.memory_space<smem>>, %arg4: memref<1x16x24xf32, #tpu.memory_space<vmem>>, %arg5: memref<32x16xbf16, #tpu.memory_space<vmem>>, %arg6: memref<24x64xbf16, #tpu.memory_space<vmem>>, %arg7: memref<2x3x32x64xf32, #tpu.memory_space<any>>, %arg8: memref<1x1x32x64xf32, #tpu.memory_space<vmem>>) attributes {dimension_semantics = [#tpu.dimension_semantics<parallel>, #tpu.dimension_semantics<parallel>], iteration_bounds = array<i64: 3, 1>, scalar_prefetch = 0 : i64, scratch_operands = 0 : i64, tpu.core_type = #tpu.core_type<tc>, window_params = [{transform_indices = @transform_0, window_bounds = array<i64: 3>}, {transform_indices = @transform_1, window_bounds = array<i64: 3>}, {transform_indices = @transform_2, window_bounds = array<i64: 1, 16, 24>}, {transform_indices = @transform_3, window_bounds = array<i64: 32, 16>}, {pipeline_mode = #tpu.pipeline_mode<synchronous>, transform_indices = @transform_4, window_bounds = array<i64: 24, 64>}, {}, {transform_indices = @transform_6, window_bounds = array<i64: 1, 1, 32, 64>}]} {
    %c0 = arith.constant 0 : index
    %c0_0 = arith.constant 0 : index
    %c0_1 = arith.constant 0 : index
    %0 = vector.load %arg4[%c0, %c0_0, %c0_1] : memref<1x16x24xf32, #tpu.memory_space<vmem>>, vector<1x16x24xf32>
    %1 = vector.shape_cast %0 : vector<1x16x24xf32> to vector<16x24xf32>
    %2 = arith.index_cast %arg0 : i32 to index
    %3 = memref.load %arg2[%2] : memref<3xf32, #tpu.memory_space<smem>>
    %4 = vector.broadcast %3 : f32 to vector<16x24xf32>
    %5 = arith.subf %1, %4 : vector<16x24xf32>
    %6 = arith.index_cast %arg0 : i32 to index
    %7 = memref.load %arg3[%6] : memref<3xf32, #tpu.memory_space<smem>>
    %8 = vector.broadcast %7 : f32 to vector<16x24xf32>
    %9 = arith.mulf %5, %8 : vector<16x24xf32>
    %10 = arith.truncf %9 : vector<16x24xf32> to vector<16x24xbf16>
    %c0_2 = arith.constant 0 : index
    %c0_3 = arith.constant 0 : index
    %11 = vector.load %arg5[%c0_2, %c0_3] : memref<32x16xbf16, #tpu.memory_space<vmem>>, vector<32x16xbf16>
    %cst = arith.constant dense<0.000000e+00> : vector<32x24xf32>
    %12 = tpu.matmul %11, %10, %cst {dimension_numbers = #tpu.dot_dimension_numbers<[1], [0], [0], [1], [0, 0, 1, 1], [], []>} : vector<32x16xbf16>, vector<16x24xbf16>, vector<32x24xf32> -> vector<32x24xf32>
    %13 = arith.truncf %12 : vector<32x24xf32> to vector<32x24xbf16>
    %c0_4 = arith.constant 0 : index
    %c0_5 = arith.constant 0 : index
    %14 = vector.load %arg6[%c0_4, %c0_5] : memref<24x64xbf16, #tpu.memory_space<vmem>>, vector<24x64xbf16>
    %cst_6 = arith.constant dense<0.000000e+00> : vector<32x64xf32>
    %15 = tpu.matmul %13, %14, %cst_6 {dimension_numbers = #tpu.dot_dimension_numbers<[1], [0], [0], [1], [0, 0, 1, 1], [], []>} : vector<32x24xbf16>, vector<24x64xbf16>, vector<32x64xf32> -> vector<32x64xf32>
    %c0_7 = arith.constant 0 : index
    %c0_8 = arith.constant 0 : index
    %c0_9 = arith.constant 0 : index
    %c0_10 = arith.constant 0 : index
    %16 = vector.load %arg8[%c0_7, %c0_8, %c0_9, %c0_10] : memref<1x1x32x64xf32, #tpu.memory_space<vmem>>, vector<1x1x32x64xf32>
    %17 = vector.shape_cast %16 : vector<1x1x32x64xf32> to vector<32x64xf32>
    %18 = vector.shape_cast %15 : vector<32x64xf32> to vector<1x1x32x64xf32>
    tpu.vector_store %arg8[%c0_7, %c0_8, %c0_9, %c0_10], %18 {strides = array<i32>} : memref<1x1x32x64xf32, #tpu.memory_space<vmem>>, vector<1x1x32x64xf32>,
    return
  }
  func.func @transform_0(%arg0: i32, %arg1: i32) -> i32 {
    %c0_i32 = arith.constant 0 : i32
    %c0_i32_0 = arith.constant 0 : i32
    return %c0_i32 : i32
  }
  func.func @transform_1(%arg0: i32, %arg1: i32) -> i32 {
    %c0_i32 = arith.constant 0 : i32
    %c0_i32_0 = arith.constant 0 : i32
    return %c0_i32 : i32
  }
  func.func @transform_2(%arg0: i32, %arg1: i32) -> (i32, i32, i32) {
    %c0_i32 = arith.constant 0 : i32
    %c0_i32_0 = arith.constant 0 : i32
    %c0_i32_1 = arith.constant 0 : i32
    return %arg0, %c0_i32, %c0_i32_0 : i32, i32, i32
  }
  func.func @transform_3(%arg0: i32, %arg1: i32) -> (i32, i32) {
    %c0_i32 = arith.constant 0 : i32
    %c0_i32_0 = arith.constant 0 : i32
    return %arg1, %c0_i32 : i32, i32
  }
  func.func @transform_4(%arg0: i32, %arg1: i32) -> (i32, i32) {
    %c0_i32 = arith.constant 0 : i32
    %c0_i32_0 = arith.constant 0 : i32
    %c0_i32_1 = arith.constant 0 : i32
    return %c0_i32, %c0_i32_0 : i32, i32
  }
  func.func @transform_6(%arg0: i32, %arg1: i32) -> (i32, i32, i32, i32) {
    %c0_i32 = arith.constant 0 : i32
    %c0_i32_0 = arith.constant 0 : i32
    %c0_i32_1 = arith.constant 0 : i32
    return %c0_i32, %arg0, %arg1, %c0_i32_0 : i32, i32, i32, i32
  }
}

module attributes {stable_mosaic.version = 11 : i64} {
  func.func @_h_first_kernel(%arg0: i32, %arg1: i32, %arg2: memref<3xf32, #tpu.memory_space<smem>>, %arg3: memref<3xf32, #tpu.memory_space<smem>>, %arg4: memref<1x20x16xf32, #tpu.memory_space<vmem>>, %arg5: memref<32x20xbf16, #tpu.memory_space<vmem>>, %arg6: memref<16x64xbf16, #tpu.memory_space<vmem>>, %arg7: memref<2x3x32x64xf32, #tpu.memory_space<any>>, %arg8: memref<1x1x32x64xf32, #tpu.memory_space<vmem>>) attributes {dimension_semantics = [#tpu.dimension_semantics<parallel>, #tpu.dimension_semantics<parallel>], iteration_bounds = array<i64: 3, 1>, scalar_prefetch = 0 : i64, scratch_operands = 0 : i64, tpu.core_type = #tpu.core_type<tc>, window_params = [{transform_indices = @transform_0, window_bounds = array<i64: 3>}, {transform_indices = @transform_1, window_bounds = array<i64: 3>}, {transform_indices = @transform_2, window_bounds = array<i64: 1, 20, 16>}, {transform_indices = @transform_3, window_bounds = array<i64: 32, 20>}, {pipeline_mode = #tpu.pipeline_mode<synchronous>, transform_indices = @transform_4, window_bounds = array<i64: 16, 64>}, {}, {transform_indices = @transform_6, window_bounds = array<i64: 1, 1, 32, 64>}]} {
    %c0 = arith.constant 0 : index
    %c0_0 = arith.constant 0 : index
    %c0_1 = arith.constant 0 : index
    %0 = vector.load %arg4[%c0, %c0_0, %c0_1] : memref<1x20x16xf32, #tpu.memory_space<vmem>>, vector<1x20x16xf32>
    %1 = vector.shape_cast %0 : vector<1x20x16xf32> to vector<20x16xf32>
    %2 = arith.index_cast %arg0 : i32 to index
    %3 = memref.load %arg2[%2] : memref<3xf32, #tpu.memory_space<smem>>
    %4 = vector.broadcast %3 : f32 to vector<20x16xf32>
    %5 = arith.subf %1, %4 : vector<20x16xf32>
    %6 = arith.index_cast %arg0 : i32 to index
    %7 = memref.load %arg3[%6] : memref<3xf32, #tpu.memory_space<smem>>
    %8 = vector.broadcast %7 : f32 to vector<20x16xf32>
    %9 = arith.mulf %5, %8 : vector<20x16xf32>
    %10 = arith.truncf %9 : vector<20x16xf32> to vector<20x16xbf16>
    %c0_2 = arith.constant 0 : index
    %c0_3 = arith.constant 0 : index
    %11 = vector.load %arg5[%c0_2, %c0_3] : memref<32x20xbf16, #tpu.memory_space<vmem>>, vector<32x20xbf16>
    %cst = arith.constant dense<0.000000e+00> : vector<32x16xf32>
    %12 = tpu.matmul %11, %10, %cst {dimension_numbers = #tpu.dot_dimension_numbers<[1], [0], [0], [1], [0, 0, 1, 1], [], []>} : vector<32x20xbf16>, vector<20x16xbf16>, vector<32x16xf32> -> vector<32x16xf32>
    %13 = arith.truncf %12 : vector<32x16xf32> to vector<32x16xbf16>
    %c0_4 = arith.constant 0 : index
    %c0_5 = arith.constant 0 : index
    %14 = vector.load %arg6[%c0_4, %c0_5] : memref<16x64xbf16, #tpu.memory_space<vmem>>, vector<16x64xbf16>
    %cst_6 = arith.constant dense<0.000000e+00> : vector<32x64xf32>
    %15 = tpu.matmul %13, %14, %cst_6 {dimension_numbers = #tpu.dot_dimension_numbers<[1], [0], [0], [1], [0, 0, 1, 1], [], []>} : vector<32x16xbf16>, vector<16x64xbf16>, vector<32x64xf32> -> vector<32x64xf32>
    %c0_7 = arith.constant 0 : index
    %c0_8 = arith.constant 0 : index
    %c0_9 = arith.constant 0 : index
    %c0_10 = arith.constant 0 : index
    %16 = vector.load %arg8[%c0_7, %c0_8, %c0_9, %c0_10] : memref<1x1x32x64xf32, #tpu.memory_space<vmem>>, vector<1x1x32x64xf32>
    %17 = vector.shape_cast %16 : vector<1x1x32x64xf32> to vector<32x64xf32>
    %18 = vector.shape_cast %15 : vector<32x64xf32> to vector<1x1x32x64xf32>
    tpu.vector_store %arg8[%c0_7, %c0_8, %c0_9, %c0_10], %18 {strides = array<i32>} : memref<1x1x32x64xf32, #tpu.memory_space<vmem>>, vector<1x1x32x64xf32>,
    return
  }
  func.func @transform_0(%arg0: i32, %arg1: i32) -> i32 {
    %c0_i32 = arith.constant 0 : i32
    %c0_i32_0 = arith.constant 0 : i32
    return %c0_i32 : i32
  }
  func.func @transform_1(%arg0: i32, %arg1: i32) -> i32 {
    %c0_i32 = arith.constant 0 : i32
    %c0_i32_0 = arith.constant 0 : i32
    return %c0_i32 : i32
  }
  func.func @transform_2(%arg0: i32, %arg1: i32) -> (i32, i32, i32) {
    %c0_i32 = arith.constant 0 : i32
    %c0_i32_0 = arith.constant 0 : i32
    %c0_i32_1 = arith.constant 0 : i32
    return %arg0, %c0_i32, %c0_i32_0 : i32, i32, i32
  }
  func.func @transform_3(%arg0: i32, %arg1: i32) -> (i32, i32) {
    %c0_i32 = arith.constant 0 : i32
    %c0_i32_0 = arith.constant 0 : i32
    return %arg1, %c0_i32 : i32, i32
  }
  func.func @transform_4(%arg0: i32, %arg1: i32) -> (i32, i32) {
    %c0_i32 = arith.constant 0 : i32
    %c0_i32_0 = arith.constant 0 : i32
    %c0_i32_1 = arith.constant 0 : i32
    return %c0_i32, %c0_i32_0 : i32, i32
  }
  func.func @transform_6(%arg0: i32, %arg1: i32) -> (i32, i32, i32, i32) {
    %c1_i32 = arith.constant 1 : i32
    %c0_i32 = arith.constant 0 : i32
    %c0_i32_0 = arith.constant 0 : i32
    return %c1_i32, %arg0, %arg1, %c0_i32 : i32, i32, i32, i32
  }
}

</mosaic_0001>

<llo_original>
// kernel: batch_fn.3
$region0: #{batch_fn.3}
  #allocation0 [shape = 'u32[]', space=smem, size = 0x4, offset = 0x4, fixed_abs, tag = 'smem constant byte address 0x4 - core index']
  #allocation1 [shape = 'u32[144,128]{1,0:T(1,128)}', space=vmem, size = 0x12000, scoped, tag = 'internal scratch']
  %s0 = inlined_call_operand.vmem [shape: f32[3], index: 0, kind: input, shape index: {}]
  %s1 = inlined_call_operand.vmem [shape: f32[3], index: 1, kind: input, shape index: {}]
  %s2 = inlined_call_operand.vmem [shape: f32[3,20,16], index: 2, kind: input, shape index: {}]
  %s3 = inlined_call_operand.vmem [shape: bf16[32,20], index: 3, kind: input, shape index: {}]
  %s4 = inlined_call_operand.vmem [shape: bf16[16,64], index: 4, kind: input, shape index: {}]
  %s5 = inlined_call_operand.hbm [shape: f32[2,3,32,64], index: 5, kind: input, shape index: {}, may-alias: {5,6}]
  %s6 = inlined_call_operand.hbm [shape: f32[2,3,32,64], index: 6, kind: output, shape index: {}, may-alias: {5,6}]
  %s7 = sld [smem:[#allocation0]]
  $region61: #{batch_fn.3} parent=0
    _
  %s9 = ssub.s32 1, %s7
  %s10 = scalar_select 0, %s9, %s7
  $region1: #{batch_fn.3} parent=0
    #allocation2 [shape = 'u8[512]{0}', space=smem, size = 0x200, scoped, tag = 'input window, operand 0, single buffered']
    #allocation3 [shape = 's32[2]{0}', space=sflag, size = 0x8, scoped, tag = 'scoped memory for batch_fn.3']
    #allocation4 [shape = 's32[2]{0}', space=sflag, size = 0x8, scoped, tag = 'scoped memory for batch_fn.3']
    #allocation5 [shape = 'u8[512]{0}', space=smem, size = 0x200, scoped, tag = 'input window, operand 1, single buffered']
    #allocation6 [shape = 's32[1]{0}', space=sflag, size = 0x4, scoped, tag = 'scoped memory for batch_fn.3']
    #allocation7 [shape = 'u8[32768]{0}', space=vmem, size = 0x8000, scoped, tag = 'output window, operand 0']
    %11 = vsyncpa [#allocation4], 0
    %12 = vsyncpa [#allocation6], 0
    %13 = vsyncpa [#allocation3], 0
    %s14 = scalar_lea.sflag [#allocation3], 1
    %15 = vsyncpa %s14, 0
    loop: start=0, step=1, limit=5
    $region2: #{batch_fn.3} parent=1 // loop_pre_header
      _
    $region3: #{batch_fn.3} parent=1 // loop_header
      %s17 = sphi 0, %s21
      %p18 = scmp.ge.s32.totalorder %s17, 5
      %s24 = sphi 0, %s36
      %s25 = sphi 0, %s32
      %s26 = sphi 0, %s24
      %s27 = sphi 0, %s25
      %s28 = sphi 0, %s26
      %s29 = sphi 0, %s27
      %s37 = sphi 0, %s37
      %s39 = sphi 0, %s37
      %s40 = sphi 0, %s39
      %s54 = sphi 0, %s40
      %s58 = sphi 0, %s58
      %s60 = sphi 0, %s58
      %s61 = sphi 0, %s60
      %s75 = sphi 0, %s61
      %s81 = sphi 0, %s83
      %s84 = sphi 0, %s81
      %s85 = sphi 0, %s84
      %s101 = sphi 0, %s85
      %s107 = sphi 0, %s109
      %s110 = sphi 0, %s107
      %s111 = sphi 0, %s110
      %s127 = sphi 0, %s111
      %s131 = sphi 0, %s131
      %s133 = sphi 0, %s131
      %s134 = sphi 0, %s133
      %s148 = sphi 0, %s134
      %s156 = sphi 0, %s158
      %s159 = sphi 0, %s156
      %s160 = sphi 0, %s159
      %s176 = sphi 0, %s160
    $region4: #{batch_fn.3} parent=1 // loop_header_branch
      %20 = sbr.rel (%p18) target = $region8
    $region5: #{batch_fn.3} parent=1 // loop_body
      %s22 = ssub.s32 %s17, 1
      %s23 = ssub.s32 %s17, 2
      %s30 = sadd.s32 1, %s25
      %p31 = scmp.ge.s32.totalorder %s30, 1
      %s32 = scalar_select %p31, 0, %s30
      %s33 = sadd.s32 1, %s24
      %s34 = scalar_select %p31, %s33, %s24
      %p35 = scmp.ge.s32.totalorder %s34, 3
      %s36 = scalar_select %p35, 0, %s34
      %s38 = sadd.s32 %s37, 1
      %p41 = scmp.eq.s32.totalorder %s17, 2
      %p42 = scmp.ne.s32.totalorder %s37, %s39
      %p43 = scmp.eq.s32.totalorder %s17, 0
      %p44 = por %p42, %p43
      %p45 = scmp.ne.s32.totalorder %s37, %s39
      %p46 = scmp.eq.s32.totalorder %s22, 2
      %p47 = por %p45, %p46
      %p48 = scmp.ne.s32.totalorder %s39, %s40
      %p49 = scmp.eq.s32.totalorder %s22, 0
      %p50 = por %p48, %p49
      %p51 = scmp.ne.s32.totalorder %s39, %s40
      %p52 = scmp.eq.s32.totalorder %s23, 2
      %p53 = por %p51, %p52
      %p55 = scmp.ne.s32.totalorder %s40, %s54
      %p56 = scmp.eq.s32.totalorder %s23, 0
      %p57 = por %p55, %p56
      %s59 = sadd.s32 %s58, 1
      %p62 = scmp.eq.s32.totalorder %s17, 2
      %p63 = scmp.ne.s32.totalorder %s58, %s60
      %p64 = scmp.eq.s32.totalorder %s17, 0
      %p65 = por %p63, %p64
      %p66 = scmp.ne.s32.totalorder %s58, %s60
      %p67 = scmp.eq.s32.totalorder %s22, 2
      %p68 = por %p66, %p67
      %p69 = scmp.ne.s32.totalorder %s60, %s61
      %p70 = scmp.eq.s32.totalorder %s22, 0
      %p71 = por %p69, %p70
      %p72 = scmp.ne.s32.totalorder %s60, %s61
      %p73 = scmp.eq.s32.totalorder %s23, 2
      %p74 = por %p72, %p73
      %p76 = scmp.ne.s32.totalorder %s61, %s75
      %p77 = scmp.eq.s32.totalorder %s23, 0
      %p78 = por %p76, %p77
      %s79 = ssub.s32 %s24, %s36
      %p80 = scmp.eq.s32.totalorder %s79, 0
      %s82 = sadd.s32 %s81, 1
      %s83 = scalar_select %p80, %s81, %s82
      %p86 = pneg %p80
      %p87 = scmp.eq.s32.totalorder %s17, 2
      %p88 = por %p86, %p87
      %p89 = scmp.ne.s32.totalorder %s81, %s84
      %p90 = scmp.eq.s32.totalorder %s17, 0
      %p91 = por %p89, %p90
      %p92 = scmp.ne.s32.totalorder %s81, %s84
      %p93 = scmp.eq.s32.totalorder %s22, 2
      %p94 = por %p92, %p93
      %p95 = scmp.ne.s32.totalorder %s84, %s85
      %p96 = scmp.eq.s32.totalorder %s22, 0
      %p97 = por %p95, %p96
      %p98 = scmp.ne.s32.totalorder %s84, %s85
      %p99 = scmp.eq.s32.totalorder %s23, 2
      %p100 = por %p98, %p99
      %p102 = scmp.ne.s32.totalorder %s85, %s101
      %p103 = scmp.eq.s32.totalorder %s23, 0
      %p104 = por %p102, %p103
      %s105 = ssub.s32 %s25, %s32
      %p106 = scmp.eq.s32.totalorder %s105, 0
      %s108 = sadd.s32 %s107, 1
      %s109 = scalar_select %p106, %s107, %s108
      %p112 = pneg %p106
      %p113 = scmp.eq.s32.totalorder %s17, 2
      %p114 = por %p112, %p113
      %p115 = scmp.ne.s32.totalorder %s107, %s110
      %p116 = scmp.eq.s32.totalorder %s17, 0
      %p117 = por %p115, %p116
      %p118 = scmp.ne.s32.totalorder %s107, %s110
      %p119 = scmp.eq.s32.totalorder %s22, 2
      %p120 = por %p118, %p119
      %p121 = scmp.ne.s32.totalorder %s110, %s111
      %p122 = scmp.eq.s32.totalorder %s22, 0
      %p123 = por %p121, %p122
      %p124 = scmp.ne.s32.totalorder %s110, %s111
      %p125 = scmp.eq.s32.totalorder %s23, 2
      %p126 = por %p124, %p125
      %p128 = scmp.ne.s32.totalorder %s111, %s127
      %p129 = scmp.eq.s32.totalorder %s23, 0
      %p130 = por %p128, %p129
      %s132 = sadd.s32 %s131, 1
      %p135 = scmp.eq.s32.totalorder %s17, 2
      %p136 = scmp.ne.s32.totalorder %s131, %s133
      %p137 = scmp.eq.s32.totalorder %s17, 0
      %p138 = por %p136, %p137
      %p139 = scmp.ne.s32.totalorder %s131, %s133
      %p140 = scmp.eq.s32.totalorder %s22, 2
      %p141 = por %p139, %p140
      %p142 = scmp.ne.s32.totalorder %s133, %s134
      %p143 = scmp.eq.s32.totalorder %s22, 0
      %p144 = por %p142, %p143
      %p145 = scmp.ne.s32.totalorder %s133, %s134
      %p146 = scmp.eq.s32.totalorder %s23, 2
      %p147 = por %p145, %p146
      %p149 = scmp.ne.s32.totalorder %s134, %s148
      %p150 = scmp.eq.s32.totalorder %s23, 0
      %p151 = por %p149, %p150
      %s152 = ssub.s32 %s24, %s36
      %s153 = ssub.s32 %s25, %s32
      %s154 = sor.u32 %s152, %s153
      %p155 = scmp.eq.s32.totalorder %s154, 0
      %s157 = sadd.s32 %s156, 1
      %s158 = scalar_select %p155, %s156, %s157
      %p161 = pneg %p155
      %p162 = scmp.eq.s32.totalorder %s17, 2
      %p163 = por %p161, %p162
      %p164 = scmp.ne.s32.totalorder %s156, %s159
      %p165 = scmp.eq.s32.totalorder %s17, 0
      %p166 = por %p164, %p165
      %p167 = scmp.ne.s32.totalorder %s156, %s159
      %p168 = scmp.eq.s32.totalorder %s22, 2
      %p169 = por %p167, %p168
      %p170 = scmp.ne.s32.totalorder %s159, %s160
      %p171 = scmp.eq.s32.totalorder %s22, 0
      %p172 = por %p170, %p171
      %p173 = scmp.ne.s32.totalorder %s159, %s160
      %p174 = scmp.eq.s32.totalorder %s23, 2
      %p175 = por %p173, %p174
      %p177 = scmp.ne.s32.totalorder %s160, %s176
      %p178 = scmp.eq.s32.totalorder %s23, 0
      %p179 = por %p177, %p178
      %p180 = scmp.le.s32.totalorder 1, %s17
      %p181 = scmp.lt.s32.totalorder %s17, 4
      %p182 = pnand %p180, %p181
      %p183 = pneg %p182
      // Predicated region
      $region9: #{batch_fn.3} parent=5 // pred_check
        _
      $region10: #{batch_fn.3} parent=5 // pred_check_branch
        %185 = sbr.rel (%p182) target = $region12
      $region11: #{batch_fn.3} parent=5 // pred_region
        %s186 = ssub.s32 %s17, 1
        // Predicated region
        $region13: #{batch_fn.3} parent=11 // pred_check
          %p187 = pneg %p50
        $region14: #{batch_fn.3} parent=11 // pred_check_branch
          %189 = sbr.rel (%p187) target = $region16
        $region15: #{batch_fn.3} parent=11 // pred_region
          %s191 = ssub.s32 16, 16
          %192 = vsyncadd [#allocation4], %s191
          %s194 = sshll.u32 %s0, 4
          %s195 = int_to_ptr.vmem [resolvable:$true] %s194
          %197 = dma.vmem_to_smem %s195, 16, [#allocation2], [#allocation4]
        $region16: #{batch_fn.3} parent=11 // pred_fallthru
          _
        // Predicated region
        $region17: #{batch_fn.3} parent=11 // pred_check
          %p198 = pneg %p71
        $region18: #{batch_fn.3} parent=11 // pred_check_branch
          %200 = sbr.rel (%p198) target = $region20
        $region19: #{batch_fn.3} parent=11 // pred_region
          %s202 = ssub.s32 16, 16
          %203 = vsyncadd [#allocation6], %s202
          %s205 = sshll.u32 %s1, 4
          %s206 = int_to_ptr.vmem [resolvable:$true] %s205
          %208 = dma.vmem_to_smem %s206, 16, [#allocation5], [#allocation6]
        $region20: #{batch_fn.3} parent=11 // pred_fallthru
          _
        // Predicated region
        $region21: #{batch_fn.3} parent=11 // pred_check
          %p209 = pneg %p123
        $region22: #{batch_fn.3} parent=11 // pred_check_branch
          %211 = sbr.rel (%p209) target = $region24
        $region23: #{batch_fn.3} parent=11 // pred_region
          %s212 = smul.u32 4, %s27
          %p213 = scmp.lt.s32.totalorder %s212, 3
          %s214 = scalar_select %p213, %s212, 3
          %s215 = smul.addr %s214, 4
          %s216 = scalar_lea.vmem %s3, %s215
          %s217 = smul.u32 4, %s27
        $region24: #{batch_fn.3} parent=11 // pred_fallthru
          _
        // Predicated region
        $region25: #{batch_fn.3} parent=11 // pred_check
          %p218 = pneg %p144
        $region26: #{batch_fn.3} parent=11 // pred_check_branch
          %220 = sbr.rel (%p218) target = $region28
        $region27: #{batch_fn.3} parent=11 // pred_region
          _
        $region28: #{batch_fn.3} parent=11 // pred_fallthru
          _
      $region12: #{batch_fn.3} parent=5 // pred_fallthru
        _
      %p221 = scmp.lt.s32.totalorder %s17, 3
      // Predicated region
      $region29: #{batch_fn.3} parent=5 // pred_check
        %p222 = pneg %p221
      $region30: #{batch_fn.3} parent=5 // pred_check_branch
        %224 = sbr.rel (%p222) target = $region32
      $region31: #{batch_fn.3} parent=5 // pred_region
        // Predicated region
        $region33: #{batch_fn.3} parent=31 // pred_check
          %p225 = pneg %p91
        $region34: #{batch_fn.3} parent=31 // pred_check_branch
          %227 = sbr.rel (%p225) target = $region36
        $region35: #{batch_fn.3} parent=31 // pred_region
          %p228 = scmp.lt.s32.totalorder %s24, 2
          %s229 = scalar_select %p228, %s24, 2
          %s230 = smul.addr %s229, 3
          %s231 = smul.addr %s230, 8
          %s232 = scalar_lea.vmem %s2, %s231
        $region36: #{batch_fn.3} parent=31 // pred_fallthru
          _
      $region32: #{batch_fn.3} parent=5 // pred_fallthru
        _
      %p233 = scmp.le.s32.totalorder 1, %s17
      %p234 = scmp.lt.s32.totalorder %s17, 4
      %p235 = pnand %p233, %p234
      %p236 = pneg %p235
      // Predicated region
      $region37: #{batch_fn.3} parent=5 // pred_check
        _
      $region38: #{batch_fn.3} parent=5 // pred_check_branch
        %238 = sbr.rel (%p235) target = $region40
      $region39: #{batch_fn.3} parent=5 // pred_region
        %s239 = ssub.s32 %s17, 1
        // Predicated region
        $region41: #{batch_fn.3} parent=39 // pred_check
          %p240 = pneg %p50
        $region42: #{batch_fn.3} parent=39 // pred_check_branch
          %242 = sbr.rel (%p240) target = $region44
        $region43: #{batch_fn.3} parent=39 // pred_region
          %243 = dma.done [#allocation4], 16
        $region44: #{batch_fn.3} parent=39 // pred_fallthru
          _
        // Predicated region
        $region45: #{batch_fn.3} parent=39 // pred_check
          %p244 = pneg %p71
        $region46: #{batch_fn.3} parent=39 // pred_check_branch
          %246 = sbr.rel (%p244) target = $region48
        $region47: #{batch_fn.3} parent=39 // pred_region
          %247 = dma.done [#allocation6], 16
        $region48: #{batch_fn.3} parent=39 // pred_fallthru
          _
        %248 = sfence
        %p249 = pneg %p50
        %p250 = pneg %p47
        %p251 = pneg %p71
        %p252 = pneg %p68
        %p253 = scmp.lt.s32.totalorder %s26, 2
        %s254 = scalar_select %p253, %s26, 2
        %s255 = smul.addr %s254, 3
        %s256 = smul.addr %s255, 8
        %s257 = scalar_lea.vmem %s2, %s256
        %p258 = pneg %p97
        %p259 = pneg %p94
        %s260 = smul.u32 4, %s27
        %p261 = scmp.lt.s32.totalorder %s260, 3
        %s262 = scalar_select %p261, %s260, 3
        %s263 = smul.addr %s262, 4
        %s264 = scalar_lea.vmem %s3, %s263
        %p265 = pneg %p123
        %p266 = pneg %p120
        %p267 = pneg %p144
        %p268 = pneg %p141
        %p269 = pneg %p172
        %p270 = pneg %p169
        %s271 = sand.u32 %s159, 1
        %s272 = scalar_lea.sflag [#allocation3], %s271
        %s273 = sand.u32 %s159, 1
        %s274 = smul.addr %s273, 32
        %s275 = scalar_lea.vmem [#allocation7], %s274
        %p276 = scmp.lt.s32.totalorder %s26, 2
        %s277 = scalar_select %p276, %s26, 2
        %s278 = smul.addr %s277, 3
        %s279 = smul.addr %s278, 8
        %s280 = scalar_lea.vmem %s2, %s279
        %s281 = smul.u32 4, %s27
        %p282 = scmp.lt.s32.totalorder %s281, 3
        %s283 = scalar_select %p282, %s281, 3
        %s284 = smul.addr %s283, 4
        %s285 = scalar_lea.vmem %s3, %s284
        %s286 = smul.u32 4, %s27
        %s287 = smul.u32 4, %s27
        %v289 = vld [vmem:[%s280] sm:$0xff]
        %v290 = vld [vmem:[%s280 + $0x8] sm:$0xff]
        %v291 = vld [vmem:[%s280 + $0x10] sm:$0xf]
        %s292 = sld [smem:[#allocation2 + %s26]]
        %v293 = vstv %s292
        %v294 = vsub.f32 %v289, %v293
        %v295 = vsub.f32 %v290, %v293
        %v296 = vsub.f32 %v291, %v293
        %s297 = sld [smem:[#allocation5 + %s26]]
        %v298 = vstv %s297
        %v299 = vmul.f32 %v294, %v298
        %v300 = vmul.f32 %v295, %v298
        %v301 = vmul.f32 %v296, %v298
        %v302 = vpack.c.bf16 %v300, %v299
        %v303 = vpack.c.bf16 %v301, %v301
        %v304 = vld [vmem:[%s285] sm:$0xf]
        %v305 = vld [vmem:[%s285 + $0x4] sm:$0xf]
        %v306 = vld [vmem:[%s285 + $0x8] sm:$0xf]
        %v307 = vld [vmem:[%s285 + $0xc] sm:$0xf]
        %v312 = vunpack.c.l.b16 %v304
        %v313 = vunpack.c.l.b16 %v305
        %v314 = vunpack.c.l.b16 %v306
        %v315 = vunpack.c.l.b16 %v307
        %v316 = vpack.c.b16 %v313, %v312
        %v317 = vpack.c.b16 %v315, %v314
        %vm318 = vcmask 162816
        %v320 = vsel %vm318, %v316, 0
        %v323 = vsel %vm318, %v317, 0
        %vm325 = vcmask 1041408
        %v327 = vsel %vm325, %v303, 0
        %329 = vmatprep.subr.bf16.mxu0 0
        %330 = vmatpush1.bf16.msra.mxu0 0
        %331 = vmatprep.subr.bf16.mxu0 0
        %332 = vmatpush1.bf16.msra.mxu0 0
        %333 = vmatprep.subr.bf16.mxu0 0
        %334 = vmatpush1.bf16.msra.mxu0 0
        %335 = vmatprep.subr.bf16.mxu0 0
        %336 = vmatpush1.bf16.msra.mxu0 0
        %337 = vmatprep.subr.bf16.mxu0 0
        %338 = vmatpush1.bf16.msra.mxu0 0
        %339 = vmatprep.subr.bf16.mxu0 0
        %340 = vmatpush1.bf16.msra.mxu0 0
        %341 = vmatprep.subr.bf16.mxu0 0
        %342 = vmatpush1.bf16.msra.mxu0 %v327
        %343 = vmatprep.subr.bf16.mxu0 0
        %344 = vmatpush1.bf16.msra.mxu0 %v302
        %345 = vmatprep.subr.bf16.mxu0 0
        %346 = vmatpush2.bf16.msra.mxu0 0
        %347 = vmatprep.subr.bf16.mxu0 0
        %348 = vmatpush2.bf16.msra.mxu0 0
        %349 = vmatprep.subr.bf16.mxu0 0
        %350 = vmatpush2.bf16.msra.mxu0 0
        %351 = vmatprep.subr.bf16.mxu0 0
        %352 = vmatpush2.bf16.msra.mxu0 0
        %353 = vmatprep.subr.bf16.mxu0 0
        %354 = vmatpush2.bf16.msra.mxu0 0
        %355 = vmatprep.subr.bf16.mxu0 0
        %356 = vmatpush2.bf16.msra.mxu0 0
        %357 = vmatprep.subr.bf16.mxu0 0
        %358 = vmatpush2.bf16.msra.mxu0 0
        %359 = vmatprep.subr.bf16.mxu0 0
        %360 = vmatpush2.bf16.msra.mxu0 0
        %361 = vmatprep.mubr.bf16.mxu0 0
        %362 = vmatmul.mubr.bf16.gmra.mxu0 %v320
        %v363 = vpop.f32.mrf.mxu0
        %v364 = vadd.f32 0.0, %v363
        %v365 = vpop.f32.mrf.mxu0
        %v366 = vpop.f32.mrf.mxu0
        %v367 = vadd.f32 0.0, %v366
        %v368 = vpop.f32.mrf.mxu0
        %369 = vmatprep.mubr.bf16.mxu0 0
        %370 = vmatmul.mubr.bf16.gmra.mxu0 %v323
        %v371 = vpop.f32.mrf.mxu0
        %v372 = vadd.f32 0.0, %v371
        %v373 = vpop.f32.mrf.mxu0
        %v374 = vpop.f32.mrf.mxu0
        %v375 = vadd.f32 0.0, %v374
        %v376 = vpop.f32.mrf.mxu0
        %377 = vdwg.mxu0
        %v378 = vpack.c.bf16 %v367, %v364
        %v379 = vpack.c.bf16 %v375, %v372
        %v380 = vld [vmem:[%s4] sm:$0xf]
        %v381 = vld [vmem:[%s4 + $0x4] sm:$0xf]
        %v384 = vunpack.c.l.b16 %v380
        %v385 = vunpack.c.l.b16 %v381
        %v386 = vpack.c.b16 %v385, %v384
        %vm388 = vcmask 130048
        %v390 = vsel %vm388, %v378, 0
        %v393 = vsel %vm388, %v379, 0
        %395 = vmatprep.subr.bf16.mxu0 0
        %396 = vmatpush1.bf16.msra.mxu0 0
        %397 = vmatprep.subr.bf16.mxu0 0
        %398 = vmatpush1.bf16.msra.mxu0 0
        %399 = vmatprep.subr.bf16.mxu0 0
        %400 = vmatpush1.bf16.msra.mxu0 0
        %401 = vmatprep.subr.bf16.mxu0 0
        %402 = vmatpush1.bf16.msra.mxu0 0
        %403 = vmatprep.subr.bf16.mxu0 0
        %404 = vmatpush1.bf16.msra.mxu0 0
        %405 = vmatprep.subr.bf16.mxu0 0
        %406 = vmatpush1.bf16.msra.mxu0 0
        %407 = vmatprep.subr.bf16.mxu0 0
        %408 = vmatpush1.bf16.msra.mxu0 0
        %409 = vmatprep.subr.bf16.mxu0 0
        %410 = vmatpush1.bf16.msra.mxu0 %v386
        %411 = vmatprep.subr.bf16.mxu0 0
        %412 = vmatpush2.bf16.msra.mxu0 0
        %413 = vmatprep.subr.bf16.mxu0 0
        %414 = vmatpush2.bf16.msra.mxu0 0
        %415 = vmatprep.subr.bf16.mxu0 0
        %416 = vmatpush2.bf16.msra.mxu0 0
        %417 = vmatprep.subr.bf16.mxu0 0
        %418 = vmatpush2.bf16.msra.mxu0 0
        %419 = vmatprep.subr.bf16.mxu0 0
        %420 = vmatpush2.bf16.msra.mxu0 0
        %421 = vmatprep.subr.bf16.mxu0 0
        %422 = vmatpush2.bf16.msra.mxu0 0
        %423 = vmatprep.subr.bf16.mxu0 0
        %424 = vmatpush2.bf16.msra.mxu0 0
        %425 = vmatprep.subr.bf16.mxu0 0
        %426 = vmatpush2.bf16.msra.mxu0 0
        %427 = vmatprep.mubr.bf16.mxu0 0
        %428 = vmatmul.mubr.bf16.gmra.mxu0 %v390
        %v429 = vpop.f32.mrf.mxu0
        %v430 = vadd.f32 0.0, %v429
        %v431 = vpop.f32.mrf.mxu0
        %v432 = vpop.f32.mrf.mxu0
        %v433 = vadd.f32 0.0, %v432
        %v434 = vpop.f32.mrf.mxu0
        %435 = vmatprep.mubr.bf16.mxu0 0
        %436 = vmatmul.mubr.bf16.gmra.mxu0 %v393
        %v437 = vpop.f32.mrf.mxu0
        %v438 = vadd.f32 0.0, %v437
        %v439 = vpop.f32.mrf.mxu0
        %v440 = vpop.f32.mrf.mxu0
        %v441 = vadd.f32 0.0, %v440
        %v442 = vpop.f32.mrf.mxu0
        %443 = vdwg.mxu0
        %vm444 = vcmask 523264
        %445 = vst.msk [vmem:[%s275] sm:$0xff] %vm444, %v430
        %446 = vst.msk [vmem:[%s275 + $0x8] sm:$0xff] %vm444, %v433
        %447 = vst.msk [vmem:[%s275 + $0x10] sm:$0xff] %vm444, %v438
        %448 = vst.msk [vmem:[%s275 + $0x18] sm:$0xff] %vm444, %v441
        %s449 = sand.u32 %s159, 1
        %s450 = scalar_lea.sflag [#allocation3], %s449
        %s451 = sand.u32 %s159, 1
        %s452 = smul.addr %s451, 32
        %s453 = scalar_lea.vmem [#allocation7], %s452
        // Predicated region
        $region49: #{batch_fn.3} parent=39 // pred_check
          %p454 = pneg %p169
        $region50: #{batch_fn.3} parent=39 // pred_check_branch
          %456 = sbr.rel (%p454) target = $region52
        $region51: #{batch_fn.3} parent=39 // pred_region
          %s457 = smul.u32 4, %s27
          %s459 = ssub.s32 512, 512
          %460 = vsyncadd %s450, %s459
          %s461 = smul.addr %s26, 4
          %s462 = sadd.s32 %s457, %s461
          %s463 = sadd.s32 %s462, 12
          %s464 = smul.addr %s463, 128
          %s465 = scalar_lea.hbm %s6, %s464
          %s466 = sshll.u32 %s453, 4
          %s467 = int_to_ptr.vmem [resolvable:$true] %s466
          %472 = dma.vmem_to_hbm [thread:$0]  %s467, 512, %s465, %s450, 128, 128, 8
        $region52: #{batch_fn.3} parent=39 // pred_fallthru
          _
      $region40: #{batch_fn.3} parent=5 // pred_fallthru
        _
      %p473 = scmp.le.s32.totalorder 2, %s17
      // Predicated region
      $region53: #{batch_fn.3} parent=5 // pred_check
        %p474 = pneg %p473
      $region54: #{batch_fn.3} parent=5 // pred_check_branch
        %476 = sbr.rel (%p474) target = $region56
      $region55: #{batch_fn.3} parent=5 // pred_region
        %s477 = ssub.s32 %s17, 2
        // Predicated region
        $region57: #{batch_fn.3} parent=55 // pred_check
          %p478 = pneg %p175
        $region58: #{batch_fn.3} parent=55 // pred_check_branch
          %480 = sbr.rel (%p478) target = $region60
        $region59: #{batch_fn.3} parent=55 // pred_region
          %s481 = sand.u32 %s160, 1
          %s482 = scalar_lea.sflag [#allocation3], %s481
          %s483 = sand.u32 %s160, 1
          %s484 = smul.addr %s483, 32
          %s485 = scalar_lea.vmem [#allocation7], %s484
          %486 = dma.done %s482, 512
        $region60: #{batch_fn.3} parent=55 // pred_fallthru
          _
      $region56: #{batch_fn.3} parent=5 // pred_fallthru
        _
    $region6: #{batch_fn.3} parent=1 // loop_footer
      %s21 = sadd.s32 1, %s17
    $region7: #{batch_fn.3} parent=1 // loop_footer_branch
      %16 = sbr.rel target = $region3
    $region8: #{batch_fn.3} parent=1 // loop_exit
      _
    %487 = vsyncpa [#allocation3], 1
    %s488 = scalar_lea.sflag [#allocation3], 1
    %489 = vsyncpa %s488, 1
    %490 = vsyncpa [#allocation4], 1
    %s491 = scalar_lea.sflag [#allocation4], 1
    %492 = vsyncpa %s491, 1
    %493 = vsyncpa [#allocation6], 1

// kernel: batch_fn.2
$region0: #{batch_fn.2}
  #allocation0 [shape = 'u32[]', space=smem, size = 0x4, offset = 0x4, fixed_abs, tag = 'smem constant byte address 0x4 - core index']
  #allocation1 [shape = 'u32[144,128]{1,0:T(1,128)}', space=vmem, size = 0x12000, scoped, tag = 'internal scratch']
  %s0 = inlined_call_operand.vmem [shape: f32[3], index: 0, kind: input, shape index: {}]
  %s1 = inlined_call_operand.vmem [shape: f32[3], index: 1, kind: input, shape index: {}]
  %s2 = inlined_call_operand.vmem [shape: f32[3,16,24], index: 2, kind: input, shape index: {}]
  %s3 = inlined_call_operand.vmem [shape: bf16[32,16], index: 3, kind: input, shape index: {}]
  %s4 = inlined_call_operand.vmem [shape: bf16[24,64], index: 4, kind: input, shape index: {}]
  %s5 = inlined_call_operand.vmem [shape: f32[2,3,32,64], index: 5, kind: input, shape index: {}, may-alias: {5,6}]
  %s6 = inlined_call_operand.vmem [shape: f32[2,3,32,64], index: 6, kind: output, shape index: {}, may-alias: {5,6}]
  %s7 = sld [smem:[#allocation0]]
  $region61: #{batch_fn.2} parent=0
    _
  %s9 = ssub.s32 1, %s7
  %s10 = scalar_select 0, %s9, %s7
  $region1: #{batch_fn.2} parent=0
    #allocation2 [shape = 'u8[512]{0}', space=smem, size = 0x200, scoped, tag = 'input window, operand 0, single buffered']
    #allocation3 [shape = 's32[2]{0}', space=sflag, size = 0x8, scoped, tag = 'scoped memory for batch_fn.2']
    #allocation4 [shape = 'u8[512]{0}', space=smem, size = 0x200, scoped, tag = 'input window, operand 1, single buffered']
    #allocation5 [shape = 's32[1]{0}', space=sflag, size = 0x4, scoped, tag = 'scoped memory for batch_fn.2']
    %11 = vsyncpa [#allocation3], 0
    %12 = vsyncpa [#allocation5], 0
    loop: start=0, step=1, limit=5
    $region2: #{batch_fn.2} parent=1 // loop_pre_header
      _
    $region3: #{batch_fn.2} parent=1 // loop_header
      %s14 = sphi 0, %s18
      %p15 = scmp.ge.s32.totalorder %s14, 5
      %s21 = sphi 0, %s33
      %s22 = sphi 0, %s29
      %s23 = sphi 0, %s21
      %s24 = sphi 0, %s22
      %s25 = sphi 0, %s23
      %s26 = sphi 0, %s24
      %s34 = sphi 0, %s34
      %s36 = sphi 0, %s34
      %s37 = sphi 0, %s36
      %s51 = sphi 0, %s37
      %s55 = sphi 0, %s55
      %s57 = sphi 0, %s55
      %s58 = sphi 0, %s57
      %s72 = sphi 0, %s58
      %s78 = sphi 0, %s80
      %s81 = sphi 0, %s78
      %s82 = sphi 0, %s81
      %s98 = sphi 0, %s82
      %s104 = sphi 0, %s106
      %s107 = sphi 0, %s104
      %s108 = sphi 0, %s107
      %s124 = sphi 0, %s108
      %s128 = sphi 0, %s128
      %s130 = sphi 0, %s128
      %s131 = sphi 0, %s130
      %s145 = sphi 0, %s131
      %s153 = sphi 0, %s155
      %s156 = sphi 0, %s153
      %s157 = sphi 0, %s156
      %s173 = sphi 0, %s157
    $region4: #{batch_fn.2} parent=1 // loop_header_branch
      %17 = sbr.rel (%p15) target = $region8
    $region5: #{batch_fn.2} parent=1 // loop_body
      %s19 = ssub.s32 %s14, 1
      %s20 = ssub.s32 %s14, 2
      %s27 = sadd.s32 1, %s22
      %p28 = scmp.ge.s32.totalorder %s27, 1
      %s29 = scalar_select %p28, 0, %s27
      %s30 = sadd.s32 1, %s21
      %s31 = scalar_select %p28, %s30, %s21
      %p32 = scmp.ge.s32.totalorder %s31, 3
      %s33 = scalar_select %p32, 0, %s31
      %s35 = sadd.s32 %s34, 1
      %p38 = scmp.eq.s32.totalorder %s14, 2
      %p39 = scmp.ne.s32.totalorder %s34, %s36
      %p40 = scmp.eq.s32.totalorder %s14, 0
      %p41 = por %p39, %p40
      %p42 = scmp.ne.s32.totalorder %s34, %s36
      %p43 = scmp.eq.s32.totalorder %s19, 2
      %p44 = por %p42, %p43
      %p45 = scmp.ne.s32.totalorder %s36, %s37
      %p46 = scmp.eq.s32.totalorder %s19, 0
      %p47 = por %p45, %p46
      %p48 = scmp.ne.s32.totalorder %s36, %s37
      %p49 = scmp.eq.s32.totalorder %s20, 2
      %p50 = por %p48, %p49
      %p52 = scmp.ne.s32.totalorder %s37, %s51
      %p53 = scmp.eq.s32.totalorder %s20, 0
      %p54 = por %p52, %p53
      %s56 = sadd.s32 %s55, 1
      %p59 = scmp.eq.s32.totalorder %s14, 2
      %p60 = scmp.ne.s32.totalorder %s55, %s57
      %p61 = scmp.eq.s32.totalorder %s14, 0
      %p62 = por %p60, %p61
      %p63 = scmp.ne.s32.totalorder %s55, %s57
      %p64 = scmp.eq.s32.totalorder %s19, 2
      %p65 = por %p63, %p64
      %p66 = scmp.ne.s32.totalorder %s57, %s58
      %p67 = scmp.eq.s32.totalorder %s19, 0
      %p68 = por %p66, %p67
      %p69 = scmp.ne.s32.totalorder %s57, %s58
      %p70 = scmp.eq.s32.totalorder %s20, 2
      %p71 = por %p69, %p70
      %p73 = scmp.ne.s32.totalorder %s58, %s72
      %p74 = scmp.eq.s32.totalorder %s20, 0
      %p75 = por %p73, %p74
      %s76 = ssub.s32 %s21, %s33
      %p77 = scmp.eq.s32.totalorder %s76, 0
      %s79 = sadd.s32 %s78, 1
      %s80 = scalar_select %p77, %s78, %s79
      %p83 = pneg %p77
      %p84 = scmp.eq.s32.totalorder %s14, 2
      %p85 = por %p83, %p84
      %p86 = scmp.ne.s32.totalorder %s78, %s81
      %p87 = scmp.eq.s32.totalorder %s14, 0
      %p88 = por %p86, %p87
      %p89 = scmp.ne.s32.totalorder %s78, %s81
      %p90 = scmp.eq.s32.totalorder %s19, 2
      %p91 = por %p89, %p90
      %p92 = scmp.ne.s32.totalorder %s81, %s82
      %p93 = scmp.eq.s32.totalorder %s19, 0
      %p94 = por %p92, %p93
      %p95 = scmp.ne.s32.totalorder %s81, %s82
      %p96 = scmp.eq.s32.totalorder %s20, 2
      %p97 = por %p95, %p96
      %p99 = scmp.ne.s32.totalorder %s82, %s98
      %p100 = scmp.eq.s32.totalorder %s20, 0
      %p101 = por %p99, %p100
      %s102 = ssub.s32 %s22, %s29
      %p103 = scmp.eq.s32.totalorder %s102, 0
      %s105 = sadd.s32 %s104, 1
      %s106 = scalar_select %p103, %s104, %s105
      %p109 = pneg %p103
      %p110 = scmp.eq.s32.totalorder %s14, 2
      %p111 = por %p109, %p110
      %p112 = scmp.ne.s32.totalorder %s104, %s107
      %p113 = scmp.eq.s32.totalorder %s14, 0
      %p114 = por %p112, %p113
      %p115 = scmp.ne.s32.totalorder %s104, %s107
      %p116 = scmp.eq.s32.totalorder %s19, 2
      %p117 = por %p115, %p116
      %p118 = scmp.ne.s32.totalorder %s107, %s108
      %p119 = scmp.eq.s32.totalorder %s19, 0
      %p120 = por %p118, %p119
      %p121 = scmp.ne.s32.totalorder %s107, %s108
      %p122 = scmp.eq.s32.totalorder %s20, 2
      %p123 = por %p121, %p122
      %p125 = scmp.ne.s32.totalorder %s108, %s124
      %p126 = scmp.eq.s32.totalorder %s20, 0
      %p127 = por %p125, %p126
      %s129 = sadd.s32 %s128, 1
      %p132 = scmp.eq.s32.totalorder %s14, 2
      %p133 = scmp.ne.s32.totalorder %s128, %s130
      %p134 = scmp.eq.s32.totalorder %s14, 0
      %p135 = por %p133, %p134
      %p136 = scmp.ne.s32.totalorder %s128, %s130
      %p137 = scmp.eq.s32.totalorder %s19, 2
      %p138 = por %p136, %p137
      %p139 = scmp.ne.s32.totalorder %s130, %s131
      %p140 = scmp.eq.s32.totalorder %s19, 0
      %p141 = por %p139, %p140
      %p142 = scmp.ne.s32.totalorder %s130, %s131
      %p143 = scmp.eq.s32.totalorder %s20, 2
      %p144 = por %p142, %p143
      %p146 = scmp.ne.s32.totalorder %s131, %s145
      %p147 = scmp.eq.s32.totalorder %s20, 0
      %p148 = por %p146, %p147
      %s149 = ssub.s32 %s21, %s33
      %s150 = ssub.s32 %s22, %s29
      %s151 = sor.u32 %s149, %s150
      %p152 = scmp.eq.s32.totalorder %s151, 0
      %s154 = sadd.s32 %s153, 1
      %s155 = scalar_select %p152, %s153, %s154
      %p158 = pneg %p152
      %p159 = scmp.eq.s32.totalorder %s14, 2
      %p160 = por %p158, %p159
      %p161 = scmp.ne.s32.totalorder %s153, %s156
      %p162 = scmp.eq.s32.totalorder %s14, 0
      %p163 = por %p161, %p162
      %p164 = scmp.ne.s32.totalorder %s153, %s156
      %p165 = scmp.eq.s32.totalorder %s19, 2
      %p166 = por %p164, %p165
      %p167 = scmp.ne.s32.totalorder %s156, %s157
      %p168 = scmp.eq.s32.totalorder %s19, 0
      %p169 = por %p167, %p168
      %p170 = scmp.ne.s32.totalorder %s156, %s157
      %p171 = scmp.eq.s32.totalorder %s20, 2
      %p172 = por %p170, %p171
      %p174 = scmp.ne.s32.totalorder %s157, %s173
      %p175 = scmp.eq.s32.totalorder %s20, 0
      %p176 = por %p174, %p175
      %p177 = scmp.le.s32.totalorder 1, %s14
      %p178 = scmp.lt.s32.totalorder %s14, 4
      %p179 = pnand %p177, %p178
      %p180 = pneg %p179
      // Predicated region
      $region9: #{batch_fn.2} parent=5 // pred_check
        _
      $region10: #{batch_fn.2} parent=5 // pred_check_branch
        %182 = sbr.rel (%p179) target = $region12
      $region11: #{batch_fn.2} parent=5 // pred_region
        %s183 = ssub.s32 %s14, 1
        // Predicated region
        $region13: #{batch_fn.2} parent=11 // pred_check
          %p184 = pneg %p47
        $region14: #{batch_fn.2} parent=11 // pred_check_branch
          %186 = sbr.rel (%p184) target = $region16
        $region15: #{batch_fn.2} parent=11 // pred_region
          %s188 = ssub.s32 16, 16
          %189 = vsyncadd [#allocation3], %s188
          %s191 = sshll.u32 %s0, 4
          %s192 = int_to_ptr.vmem [resolvable:$true] %s191
          %194 = dma.vmem_to_smem %s192, 16, [#allocation2], [#allocation3]
        $region16: #{batch_fn.2} parent=11 // pred_fallthru
          _
        // Predicated region
        $region17: #{batch_fn.2} parent=11 // pred_check
          %p195 = pneg %p68
        $region18: #{batch_fn.2} parent=11 // pred_check_branch
          %197 = sbr.rel (%p195) target = $region20
        $region19: #{batch_fn.2} parent=11 // pred_region
          %s199 = ssub.s32 16, 16
          %200 = vsyncadd [#allocation5], %s199
          %s202 = sshll.u32 %s1, 4
          %s203 = int_to_ptr.vmem [resolvable:$true] %s202
          %205 = dma.vmem_to_smem %s203, 16, [#allocation4], [#allocation5]
        $region20: #{batch_fn.2} parent=11 // pred_fallthru
          _
        // Predicated region
        $region21: #{batch_fn.2} parent=11 // pred_check
          %p206 = pneg %p120
        $region22: #{batch_fn.2} parent=11 // pred_check_branch
          %208 = sbr.rel (%p206) target = $region24
        $region23: #{batch_fn.2} parent=11 // pred_region
          %s209 = smul.u32 4, %s24
          %p210 = scmp.lt.s32.totalorder %s209, 3
          %s211 = scalar_select %p210, %s209, 3
          %s212 = smul.addr %s211, 4
          %s213 = scalar_lea.vmem %s3, %s212
          %s214 = smul.u32 4, %s24
        $region24: #{batch_fn.2} parent=11 // pred_fallthru
          _
        // Predicated region
        $region25: #{batch_fn.2} parent=11 // pred_check
          %p215 = pneg %p141
        $region26: #{batch_fn.2} parent=11 // pred_check_branch
          %217 = sbr.rel (%p215) target = $region28
        $region27: #{batch_fn.2} parent=11 // pred_region
          _
        $region28: #{batch_fn.2} parent=11 // pred_fallthru
          _
      $region12: #{batch_fn.2} parent=5 // pred_fallthru
        _
      %p218 = scmp.lt.s32.totalorder %s14, 3
      // Predicated region
      $region29: #{batch_fn.2} parent=5 // pred_check
        %p219 = pneg %p218
      $region30: #{batch_fn.2} parent=5 // pred_check_branch
        %221 = sbr.rel (%p219) target = $region32
      $region31: #{batch_fn.2} parent=5 // pred_region
        // Predicated region
        $region33: #{batch_fn.2} parent=31 // pred_check
          %p222 = pneg %p88
        $region34: #{batch_fn.2} parent=31 // pred_check_branch
          %224 = sbr.rel (%p222) target = $region36
        $region35: #{batch_fn.2} parent=31 // pred_region
          %p225 = scmp.lt.s32.totalorder %s21, 2
          %s226 = scalar_select %p225, %s21, 2
          %s227 = smul.addr %s226, 2
          %s228 = smul.addr %s227, 8
          %s229 = scalar_lea.vmem %s2, %s228
        $region36: #{batch_fn.2} parent=31 // pred_fallthru
          _
      $region32: #{batch_fn.2} parent=5 // pred_fallthru
        _
      %p230 = scmp.le.s32.totalorder 1, %s14
      %p231 = scmp.lt.s32.totalorder %s14, 4
      %p232 = pnand %p230, %p231
      %p233 = pneg %p232
      // Predicated region
      $region37: #{batch_fn.2} parent=5 // pred_check
        _
      $region38: #{batch_fn.2} parent=5 // pred_check_branch
        %235 = sbr.rel (%p232) target = $region40
      $region39: #{batch_fn.2} parent=5 // pred_region
        %s236 = ssub.s32 %s14, 1
        // Predicated region
        $region41: #{batch_fn.2} parent=39 // pred_check
          %p237 = pneg %p47
        $region42: #{batch_fn.2} parent=39 // pred_check_branch
          %239 = sbr.rel (%p237) target = $region44
        $region43: #{batch_fn.2} parent=39 // pred_region
          %240 = dma.done [#allocation3], 16
        $region44: #{batch_fn.2} parent=39 // pred_fallthru
          _
        // Predicated region
        $region45: #{batch_fn.2} parent=39 // pred_check
          %p241 = pneg %p68
        $region46: #{batch_fn.2} parent=39 // pred_check_branch
          %243 = sbr.rel (%p241) target = $region48
        $region47: #{batch_fn.2} parent=39 // pred_region
          %244 = dma.done [#allocation5], 16
        $region48: #{batch_fn.2} parent=39 // pred_fallthru
          _
        %245 = sfence
        %p246 = pneg %p47
        %p247 = pneg %p44
        %p248 = pneg %p68
        %p249 = pneg %p65
        %p250 = scmp.lt.s32.totalorder %s23, 2
        %s251 = scalar_select %p250, %s23, 2
        %s252 = smul.addr %s251, 2
        %s253 = smul.addr %s252, 8
        %s254 = scalar_lea.vmem %s2, %s253
        %p255 = pneg %p94
        %p256 = pneg %p91
        %s257 = smul.u32 4, %s24
        %p258 = scmp.lt.s32.totalorder %s257, 3
        %s259 = scalar_select %p258, %s257, 3
        %s260 = smul.addr %s259, 4
        %s261 = scalar_lea.vmem %s3, %s260
        %p262 = pneg %p120
        %p263 = pneg %p117
        %p264 = pneg %p141
        %p265 = pneg %p138
        %p266 = pneg %p169
        %p267 = pneg %p166
        %s268 = smul.u32 4, %s24
        %p269 = scmp.lt.s32.totalorder %s23, 2
        %s270 = scalar_select %p269, %s23, 2
        %p271 = scmp.lt.s32.totalorder %s268, 3
        %s272 = scalar_select %p271, %s268, 3
        %s273 = smul.addr %s270, 4
        %s274 = sadd.s32 %s272, %s273
        %s275 = smul.addr %s274, 8
        %s276 = scalar_lea.vmem %s6, %s275
        %p277 = scmp.lt.s32.totalorder %s23, 2
        %s278 = scalar_select %p277, %s23, 2
        %s279 = smul.addr %s278, 2
        %s280 = smul.addr %s279, 8
        %s281 = scalar_lea.vmem %s2, %s280
        %s282 = smul.u32 4, %s24
        %p283 = scmp.lt.s32.totalorder %s282, 3
        %s284 = scalar_select %p283, %s282, 3
        %s285 = smul.addr %s284, 4
        %s286 = scalar_lea.vmem %s3, %s285
        %s287 = smul.u32 4, %s24
        %s288 = smul.u32 4, %s24
        %p289 = scmp.lt.s32.totalorder %s23, 2
        %s290 = scalar_select %p289, %s23, 2
        %p291 = scmp.lt.s32.totalorder %s288, 3
        %s292 = scalar_select %p291, %s288, 3
        %s293 = smul.addr %s290, 4
        %s294 = sadd.s32 %s292, %s293
        %s295 = smul.addr %s294, 8
        %s296 = scalar_lea.vmem %s6, %s295
        %s297 = smul.u32 4, %s24
        %v299 = vld [vmem:[%s281] sm:$0xff]
        %v300 = vld [vmem:[%s281 + $0x8] sm:$0xff]
        %s301 = sld [smem:[#allocation2 + %s23]]
        %v302 = vstv %s301
        %v303 = vsub.f32 %v299, %v302
        %v304 = vsub.f32 %v300, %v302
        %s305 = sld [smem:[#allocation4 + %s23]]
        %v306 = vstv %s305
        %v307 = vmul.f32 %v303, %v306
        %v308 = vmul.f32 %v304, %v306
        %v309 = vpack.c.bf16 %v308, %v307
        %v310 = vld [vmem:[%s286] sm:$0xf]
        %v311 = vld [vmem:[%s286 + $0x4] sm:$0xf]
        %v312 = vld [vmem:[%s286 + $0x8] sm:$0xf]
        %v313 = vld [vmem:[%s286 + $0xc] sm:$0xf]
        %v318 = vunpack.c.l.b16 %v310
        %v319 = vunpack.c.l.b16 %v311
        %v320 = vunpack.c.l.b16 %v312
        %v321 = vunpack.c.l.b16 %v313
        %v322 = vpack.c.b16 %v319, %v318
        %v323 = vpack.c.b16 %v321, %v320
        %vm324 = vcmask 130048
        %v326 = vsel %vm324, %v322, 0
        %v329 = vsel %vm324, %v323, 0
        %331 = vmatprep.subr.bf16.mxu0 0
        %332 = vmatpush1.bf16.msra.mxu0 0
        %333 = vmatprep.subr.bf16.mxu0 0
        %334 = vmatpush1.bf16.msra.mxu0 0
        %335 = vmatprep.subr.bf16.mxu0 0
        %336 = vmatpush1.bf16.msra.mxu0 0
        %337 = vmatprep.subr.bf16.mxu0 0
        %338 = vmatpush1.bf16.msra.mxu0 0
        %339 = vmatprep.subr.bf16.mxu0 0
        %340 = vmatpush1.bf16.msra.mxu0 0
        %341 = vmatprep.subr.bf16.mxu0 0
        %342 = vmatpush1.bf16.msra.mxu0 0
        %343 = vmatprep.subr.bf16.mxu0 0
        %344 = vmatpush1.bf16.msra.mxu0 0
        %345 = vmatprep.subr.bf16.mxu0 0
        %346 = vmatpush1.bf16.msra.mxu0 %v309
        %347 = vmatprep.subr.bf16.mxu0 0
        %348 = vmatpush2.bf16.msra.mxu0 0
        %349 = vmatprep.subr.bf16.mxu0 0
        %350 = vmatpush2.bf16.msra.mxu0 0
        %351 = vmatprep.subr.bf16.mxu0 0
        %352 = vmatpush2.bf16.msra.mxu0 0
        %353 = vmatprep.subr.bf16.mxu0 0
        %354 = vmatpush2.bf16.msra.mxu0 0
        %355 = vmatprep.subr.bf16.mxu0 0
        %356 = vmatpush2.bf16.msra.mxu0 0
        %357 = vmatprep.subr.bf16.mxu0 0
        %358 = vmatpush2.bf16.msra.mxu0 0
        %359 = vmatprep.subr.bf16.mxu0 0
        %360 = vmatpush2.bf16.msra.mxu0 0
        %361 = vmatprep.subr.bf16.mxu0 0
        %362 = vmatpush2.bf16.msra.mxu0 0
        %363 = vmatprep.mubr.bf16.mxu0 0
        %364 = vmatmul.mubr.bf16.gmra.mxu0 %v326
        %v365 = vpop.f32.mrf.mxu0
        %v366 = vadd.f32 0.0, %v365
        %v367 = vpop.f32.mrf.mxu0
        %v368 = vpop.f32.mrf.mxu0
        %v369 = vadd.f32 0.0, %v368
        %v370 = vpop.f32.mrf.mxu0
        %371 = vmatprep.mubr.bf16.mxu0 0
        %372 = vmatmul.mubr.bf16.gmra.mxu0 %v329
        %v373 = vpop.f32.mrf.mxu0
        %v374 = vadd.f32 0.0, %v373
        %v375 = vpop.f32.mrf.mxu0
        %v376 = vpop.f32.mrf.mxu0
        %v377 = vadd.f32 0.0, %v376
        %v378 = vpop.f32.mrf.mxu0
        %379 = vdwg.mxu0
        %v380 = vpack.c.bf16 %v369, %v366
        %v381 = vpack.c.bf16 %v377, %v374
        %v382 = vld [vmem:[%s4] sm:$0xf]
        %v383 = vld [vmem:[%s4 + $0x4] sm:$0xf]
        %v384 = vld [vmem:[%s4 + $0x8] sm:$0xf]
        %v388 = vunpack.c.l.b16 %v382
        %v389 = vunpack.c.l.b16 %v383
        %v390 = vunpack.c.l.b16 %v384
        %v391 = vpack.c.b16 %v389, %v388
        %v392 = vpack.c.b16 %v390, %v390
        %vm394 = vcmask 195584
        %v396 = vsel %vm394, %v380, 0
        %v399 = vsel %vm394, %v381, 0
        %vm401 = vcmask 1043456
        %v403 = vsel %vm401, %v392, 0
        %405 = vmatprep.subr.bf16.mxu0 0
        %406 = vmatpush1.bf16.msra.mxu0 0
        %407 = vmatprep.subr.bf16.mxu0 0
        %408 = vmatpush1.bf16.msra.mxu0 0
        %409 = vmatprep.subr.bf16.mxu0 0
        %410 = vmatpush1.bf16.msra.mxu0 0
        %411 = vmatprep.subr.bf16.mxu0 0
        %412 = vmatpush1.bf16.msra.mxu0 0
        %413 = vmatprep.subr.bf16.mxu0 0
        %414 = vmatpush1.bf16.msra.mxu0 0
        %415 = vmatprep.subr.bf16.mxu0 0
        %416 = vmatpush1.bf16.msra.mxu0 0
        %417 = vmatprep.subr.bf16.mxu0 0
        %418 = vmatpush1.bf16.msra.mxu0 %v403
        %419 = vmatprep.subr.bf16.mxu0 0
        %420 = vmatpush1.bf16.msra.mxu0 %v391
        %421 = vmatprep.subr.bf16.mxu0 0
        %422 = vmatpush2.bf16.msra.mxu0 0
        %423 = vmatprep.subr.bf16.mxu0 0
        %424 = vmatpush2.bf16.msra.mxu0 0
        %425 = vmatprep.subr.bf16.mxu0 0
        %426 = vmatpush2.bf16.msra.mxu0 0
        %427 = vmatprep.subr.bf16.mxu0 0
        %428 = vmatpush2.bf16.msra.mxu0 0
        %429 = vmatprep.subr.bf16.mxu0 0
        %430 = vmatpush2.bf16.msra.mxu0 0
        %431 = vmatprep.subr.bf16.mxu0 0
        %432 = vmatpush2.bf16.msra.mxu0 0
        %433 = vmatprep.subr.bf16.mxu0 0
        %434 = vmatpush2.bf16.msra.mxu0 0
        %435 = vmatprep.subr.bf16.mxu0 0
        %436 = vmatpush2.bf16.msra.mxu0 0
        %437 = vmatprep.mubr.bf16.mxu0 0
        %438 = vmatmul.mubr.bf16.gmra.mxu0 %v396
        %v439 = vpop.f32.mrf.mxu0
        %v440 = vadd.f32 0.0, %v439
        %v441 = vpop.f32.mrf.mxu0
        %v442 = vpop.f32.mrf.mxu0
        %v443 = vadd.f32 0.0, %v442
        %v444 = vpop.f32.mrf.mxu0
        %445 = vmatprep.mubr.bf16.mxu0 0
        %446 = vmatmul.mubr.bf16.gmra.mxu0 %v399
        %v447 = vpop.f32.mrf.mxu0
        %v448 = vadd.f32 0.0, %v447
        %v449 = vpop.f32.mrf.mxu0
        %v450 = vpop.f32.mrf.mxu0
        %v451 = vadd.f32 0.0, %v450
        %v452 = vpop.f32.mrf.mxu0
        %453 = vdwg.mxu0
        %vm454 = vcmask 523264
        %455 = vst.msk [vmem:[%s296] sm:$0xff] %vm454, %v440
        %456 = vst.msk [vmem:[%s296 + $0x8] sm:$0xff] %vm454, %v443
        %457 = vst.msk [vmem:[%s296 + $0x10] sm:$0xff] %vm454, %v448
        %458 = vst.msk [vmem:[%s296 + $0x18] sm:$0xff] %vm454, %v451
        %s459 = smul.u32 4, %s24
        %p460 = scmp.lt.s32.totalorder %s23, 2
        %s461 = scalar_select %p460, %s23, 2
        %p462 = scmp.lt.s32.totalorder %s459, 3
        %s463 = scalar_select %p462, %s459, 3
        %s464 = smul.addr %s461, 4
        %s465 = sadd.s32 %s463, %s464
        %s466 = smul.addr %s465, 8
        %s467 = scalar_lea.vmem %s6, %s466
        // Predicated region
        $region49: #{batch_fn.2} parent=39 // pred_check
          %p468 = pneg %p166
        $region50: #{batch_fn.2} parent=39 // pred_check_branch
          %470 = sbr.rel (%p468) target = $region52
        $region51: #{batch_fn.2} parent=39 // pred_region
          %s471 = smul.u32 4, %s24
        $region52: #{batch_fn.2} parent=39 // pred_fallthru
          _
      $region40: #{batch_fn.2} parent=5 // pred_fallthru
        _
      %p472 = scmp.le.s32.totalorder 2, %s14
      // Predicated region
      $region53: #{batch_fn.2} parent=5 // pred_check
        %p473 = pneg %p472
      $region54: #{batch_fn.2} parent=5 // pred_check_branch
        %475 = sbr.rel (%p473) target = $region56
      $region55: #{batch_fn.2} parent=5 // pred_region
        %s476 = ssub.s32 %s14, 2
        // Predicated region
        $region57: #{batch_fn.2} parent=55 // pred_check
          %p477 = pneg %p172
        $region58: #{batch_fn.2} parent=55 // pred_check_branch
          %479 = sbr.rel (%p477) target = $region60
        $region59: #{batch_fn.2} parent=55 // pred_region
          %s480 = smul.u32 4, %s26
          %p481 = scmp.lt.s32.totalorder %s25, 2
          %s482 = scalar_select %p481, %s25, 2
          %p483 = scmp.lt.s32.totalorder %s480, 3
          %s484 = scalar_select %p483, %s480, 3
          %s485 = smul.addr %s482, 4
          %s486 = sadd.s32 %s484, %s485
          %s487 = smul.addr %s486, 8
          %s488 = scalar_lea.vmem %s6, %s487
        $region60: #{batch_fn.2} parent=55 // pred_fallthru
          _
      $region56: #{batch_fn.2} parent=5 // pred_fallthru
        _
    $region6: #{batch_fn.2} parent=1 // loop_footer
      %s18 = sadd.s32 1, %s14
    $region7: #{batch_fn.2} parent=1 // loop_footer_branch
      %13 = sbr.rel target = $region3
    $region8: #{batch_fn.2} parent=1 // loop_exit
      _
    %489 = vsyncpa [#allocation3], 1
    %s490 = scalar_lea.sflag [#allocation3], 1
    %491 = vsyncpa %s490, 1
    %492 = vsyncpa [#allocation5], 1

</llo_original>
